<compile_context>
chip_gen: v6e
topology: v6e:2x2x1
jax: 0.10.0
libtpu: 0.0.40
codegen_flags: <defaults>
</compile_context>

<pallas_src>
import functools

import jax
import jax.numpy as jnp
from jax.experimental import pallas as pl
from jax.experimental.pallas import tpu as pltpu

LANE = 128      # vreg lane width
SUBLANE = 8     # f32 sublane count


def _round_up(x, m):
    return (x + m - 1) // m * m


def dqn_kernel(x_ref, w1_ref, b1_ref, w2_ref, b2_ref, w3_ref, b3_ref, o_ref):
    # Fused MLP on one batch tile.  Every operand is lane-dense, so the three
    # matmuls, the bias adds, the ReLUs and the output store are full-vreg /
    # unmasked ops.
    x = x_ref[...]
    h1 = jnp.dot(x, w1_ref[...], preferred_element_type=jnp.float32) + b1_ref[...]
    h1 = jnp.maximum(h1, 0.0)
    h2 = jnp.dot(h1, w2_ref[...], preferred_element_type=jnp.float32) + b2_ref[...]
    h2 = jnp.maximum(h2, 0.0)
    o_ref[...] = (
        jnp.dot(h2, w3_ref[...], preferred_element_type=jnp.float32) + b3_ref[...]
    ).astype(o_ref.dtype)


@functools.partial(jax.jit, static_argnames=("n_actions", "block_b"))
def dqn_forward(x, padded_params, n_actions, block_b=128):
    """x: [batch, n_observations] f32.  Returns [batch, n_actions] Q-values."""
    w1, b1, w2, b2, w3, b3 = padded_params
    batch, n_obs = x.shape
    in_pad = w1.shape[0]
    h_pad = w1.shape[1]
    out_pad = w3.shape[1]

    # Pad batch to a sublane-aligned tile; pad features to the weight's in-dim.
    # Skip the pad entirely when shapes already line up (common replay case).
    tile_b = min(block_b, _round_up(max(batch, SUBLANE), SUBLANE))
    b_pad = _round_up(max(batch, tile_b), tile_b)
    if b_pad != batch or in_pad != n_obs:
        x_pad = jnp.pad(x, ((0, b_pad - batch), (0, in_pad - n_obs)))
    else:
        x_pad = x

    grid = (b_pad // tile_b,)
    resident = lambda i: (0, 0)  # weights/biases stay VMEM-resident across tiles

    flops = 2 * b_pad * (in_pad * h_pad + h_pad * h_pad + h_pad * out_pad)
    bytes_accessed = 4 * (
        x_pad.size + w1.size + b1.size + w2.size + b2.size + w3.size + b3.size
        + b_pad * out_pad
    )

    out = pl.pallas_call(
        dqn_kernel,
        out_shape=jax.ShapeDtypeStruct((b_pad, out_pad), jnp.float32),
        grid=grid,
        in_specs=[
            pl.BlockSpec((tile_b, in_pad), lambda i: (i, 0)),   # activations: tiled
            pl.BlockSpec(w1.shape, resident),
            pl.BlockSpec(b1.shape, resident),
            pl.BlockSpec(w2.shape, resident),
            pl.BlockSpec(b2.shape, resident),
            pl.BlockSpec(w3.shape, resident),
            pl.BlockSpec(b3.shape, resident),
        ],
        out_specs=pl.BlockSpec((tile_b, out_pad), lambda i: (i, 0)),
        compiler_params=pltpu.CompilerParams(
            dimension_semantics=("parallel",),  # v7x: shard batch tiles over 2 TCs
        ),
        cost_estimate=pl.CostEstimate(
            flops=flops, transcendentals=0, bytes_accessed=bytes_accessed
        ),
    )(x_pad, w1, b1, w2, b2, w3, b3)

    return out[:batch, :n_actions]


def init_dqn_params(key, n_observations, n_actions, hidden=64):
    """Deterministic init mimicking PyTorch nn.Linear default U(-1/sqrt(fan_in), +).
    Returned in logical (unpadded) [in, out] / [out] layout."""
    ks = jax.random.split(key, 6)

    def linear(kw, kb, fan_in, fan_out):
        bound = 1.0 / jnp.sqrt(float(fan_in))
        w = jax.random.uniform(kw, (fan_in, fan_out), jnp.float32, -bound, bound)
        b = jax.random.uniform(kb, (fan_out,), jnp.float32, -bound, bound)
        return w, b

    w1, b1 = linear(ks[0], ks[1], n_observations, hidden)
    w2, b2 = linear(ks[2], ks[3], hidden, hidden)
    w3, b3 = linear(ks[4], ks[5], hidden, n_actions)
    return (w1, b1, w2, b2, w3, b3)


def pad_params_for_tpu(params):
    """Zero-pad params to TPU-friendly lane-dense tiles (done once, offline)."""
    w1, b1, w2, b2, w3, b3 = params
    n_obs, hidden = w1.shape
    n_actions = w3.shape[1]
    in_pad = _round_up(n_obs, SUBLANE)
    h_pad = _round_up(hidden, LANE)
    out_pad = _round_up(n_actions, LANE)

    def pad_to(a, shape):
        return jnp.zeros(shape, a.dtype).at[
            tuple(slice(0, s) for s in a.shape)
        ].set(a)

    return (
        pad_to(w1, (in_pad, h_pad)),
        pad_to(b1.reshape(1, -1), (1, h_pad)),
        pad_to(w2, (h_pad, h_pad)),
        pad_to(b2.reshape(1, -1), (1, h_pad)),
        pad_to(w3, (h_pad, out_pad)),
        pad_to(b3.reshape(1, -1), (1, out_pad)),
    )


def dqn_reference(x, params):
    w1, b1, w2, b2, w3, b3 = params
    h1 = jnp.maximum(x @ w1 + b1, 0.0)
    h2 = jnp.maximum(h1 @ w2 + b2, 0.0)
    return h2 @ w3 + b3


if __name__ == "__main__":
    # LunarLander-v3: observation dim = 8, action dim = 4
    n_observations, n_actions, batch = 8, 4, 2

    key = jax.random.PRNGKey(0)
    kx, kp = jax.random.split(key)
    x = jax.random.normal(kx, (batch, n_observations), jnp.float32)

    params = init_dqn_params(kp, n_observations, n_actions)
    padded_params = pad_params_for_tpu(params)

    # Small action-selection-sized batch (single grid step, padded to 8 rows).
    out = jax.block_until_ready(dqn_forward(x, padded_params, n_actions=n_actions))
    ref = dqn_reference(x, params)
    assert out.shape == (batch, n_actions)
    assert jnp.allclose(out, ref, atol=1e-5, rtol=1e-5)

    # Replay-minibatch-sized batch: exercises the pipelined multi-tile grid
    # with VMEM-resident weights (2 grid steps of 128 rows, no host-side pad).
    xb = jax.random.normal(kx, (256, n_observations), jnp.float32)
    outb = jax.block_until_ready(dqn_forward(xb, padded_params, n_actions=n_actions))
    refb = dqn_reference(xb, params)
    assert outb.shape == (256, n_actions)
    assert jnp.allclose(outb, refb, atol=1e-4, rtol=1e-4)

    print("KERNEL_OK")
</pallas_src>

<mosaic_0001>
module attributes {stable_mosaic.version = 11 : i64} {
  func.func @dqn_kernel(%arg0: i32, %arg1: memref<8x8xf32, #tpu.memory_space<vmem>>, %arg2: memref<8x128xf32, #tpu.memory_space<vmem>>, %arg3: memref<1x128xf32, #tpu.memory_space<vmem>>, %arg4: memref<128x128xf32, #tpu.memory_space<vmem>>, %arg5: memref<1x128xf32, #tpu.memory_space<vmem>>, %arg6: memref<128x128xf32, #tpu.memory_space<vmem>>, %arg7: memref<1x128xf32, #tpu.memory_space<vmem>>, %arg8: memref<8x128xf32, #tpu.memory_space<vmem>>) attributes {dimension_semantics = [#tpu.dimension_semantics<parallel>], iteration_bounds = array<i64: 1>, scalar_prefetch = 0 : i64, scratch_operands = 0 : i64, tpu.core_type = #tpu.core_type<tc>, window_params = [{transform_indices = @transform_0, window_bounds = array<i64: 8, 8>}, {pipeline_mode = #tpu.pipeline_mode<synchronous>, transform_indices = @transform_1, window_bounds = array<i64: 8, 128>}, {pipeline_mode = #tpu.pipeline_mode<synchronous>, transform_indices = @transform_2, window_bounds = array<i64: 1, 128>}, {pipeline_mode = #tpu.pipeline_mode<synchronous>, transform_indices = @transform_3, window_bounds = array<i64: 128, 128>}, {pipeline_mode = #tpu.pipeline_mode<synchronous>, transform_indices = @transform_4, window_bounds = array<i64: 1, 128>}, {pipeline_mode = #tpu.pipeline_mode<synchronous>, transform_indices = @transform_5, window_bounds = array<i64: 128, 128>}, {pipeline_mode = #tpu.pipeline_mode<synchronous>, transform_indices = @transform_6, window_bounds = array<i64: 1, 128>}, {transform_indices = @transform_7, window_bounds = array<i64: 8, 128>}]} {
    %c0 = arith.constant 0 : index
    %c0_0 = arith.constant 0 : index
    %0 = vector.load %arg1[%c0, %c0_0] : memref<8x8xf32, #tpu.memory_space<vmem>>, vector<8x8xf32>
    %c0_1 = arith.constant 0 : index
    %c0_2 = arith.constant 0 : index
    %1 = vector.load %arg2[%c0_1, %c0_2] : memref<8x128xf32, #tpu.memory_space<vmem>>, vector<8x128xf32>
    %cst = arith.constant dense<0.000000e+00> : vector<8x128xf32>
    %2 = tpu.matmul %0, %1, %cst {dimension_numbers = #tpu.dot_dimension_numbers<[1], [0], [0], [1], [0, 0, 1, 1], [], []>} : vector<8x8xf32>, vector<8x128xf32>, vector<8x128xf32> -> vector<8x128xf32>
    %c0_3 = arith.constant 0 : index
    %c0_4 = arith.constant 0 : index
    %3 = vector.load %arg3[%c0_3, %c0_4] : memref<1x128xf32, #tpu.memory_space<vmem>>, vector<1x128xf32>
    %4 = vector.broadcast %3 : vector<1x128xf32> to vector<8x128xf32>
    %5 = arith.addf %2, %4 : vector<8x128xf32>
    %cst_5 = arith.constant 0.000000e+00 : f32
    %6 = vector.broadcast %cst_5 : f32 to vector<8x128xf32>
    %7 = arith.maximumf %5, %6 : vector<8x128xf32>
    %c0_6 = arith.constant 0 : index
    %c0_7 = arith.constant 0 : index
    %8 = vector.load %arg4[%c0_6, %c0_7] : memref<128x128xf32, #tpu.memory_space<vmem>>, vector<128x128xf32>
    %cst_8 = arith.constant dense<0.000000e+00> : vector<8x128xf32>
    %9 = tpu.matmul %7, %8, %cst_8 {dimension_numbers = #tpu.dot_dimension_numbers<[1], [0], [0], [1], [0, 0, 1, 1], [], []>} : vector<8x128xf32>, vector<128x128xf32>, vector<8x128xf32> -> vector<8x128xf32>
    %c0_9 = arith.constant 0 : index
    %c0_10 = arith.constant 0 : index
    %10 = vector.load %arg5[%c0_9, %c0_10] : memref<1x128xf32, #tpu.memory_space<vmem>>, vector<1x128xf32>
    %11 = vector.broadcast %10 : vector<1x128xf32> to vector<8x128xf32>
    %12 = arith.addf %9, %11 : vector<8x128xf32>
    %cst_11 = arith.constant 0.000000e+00 : f32
    %13 = vector.broadcast %cst_11 : f32 to vector<8x128xf32>
    %14 = arith.maximumf %12, %13 : vector<8x128xf32>
    %c0_12 = arith.constant 0 : index
    %c0_13 = arith.constant 0 : index
    %15 = vector.load %arg6[%c0_12, %c0_13] : memref<128x128xf32, #tpu.memory_space<vmem>>, vector<128x128xf32>
    %cst_14 = arith.constant dense<0.000000e+00> : vector<8x128xf32>
    %16 = tpu.matmul %14, %15, %cst_14 {dimension_numbers = #tpu.dot_dimension_numbers<[1], [0], [0], [1], [0, 0, 1, 1], [], []>} : vector<8x128xf32>, vector<128x128xf32>, vector<8x128xf32> -> vector<8x128xf32>
    %c0_15 = arith.constant 0 : index
    %c0_16 = arith.constant 0 : index
    %17 = vector.load %arg7[%c0_15, %c0_16] : memref<1x128xf32, #tpu.memory_space<vmem>>, vector<1x128xf32>
    %18 = vector.broadcast %17 : vector<1x128xf32> to vector<8x128xf32>
    %19 = arith.addf %16, %18 : vector<8x128xf32>
    %c0_17 = arith.constant 0 : index
    %c0_18 = arith.constant 0 : index
    %20 = vector.load %arg8[%c0_17, %c0_18] : memref<8x128xf32, #tpu.memory_space<vmem>>, vector<8x128xf32>
    tpu.vector_store %arg8[%c0_17, %c0_18], %19 {strides = array<i32>} : memref<8x128xf32, #tpu.memory_space<vmem>>, vector<8x128xf32>,
    return
  }
  func.func @transform_0(%arg0: i32) -> (i32, i32) {
    %c0_i32 = arith.constant 0 : i32
    %c0_i32_0 = arith.constant 0 : i32
    return %arg0, %c0_i32 : i32, i32
  }
  func.func @transform_1(%arg0: i32) -> (i32, i32) {
    %c0_i32 = arith.constant 0 : i32
    %c0_i32_0 = arith.constant 0 : i32
    %c0_i32_1 = arith.constant 0 : i32
    return %c0_i32, %c0_i32_0 : i32, i32
  }
  func.func @transform_2(%arg0: i32) -> (i32, i32) {
    %c0_i32 = arith.constant 0 : i32
    %c0_i32_0 = arith.constant 0 : i32
    %c0_i32_1 = arith.constant 0 : i32
    return %c0_i32, %c0_i32_0 : i32, i32
  }
  func.func @transform_3(%arg0: i32) -> (i32, i32) {
    %c0_i32 = arith.constant 0 : i32
    %c0_i32_0 = arith.constant 0 : i32
    %c0_i32_1 = arith.constant 0 : i32
    return %c0_i32, %c0_i32_0 : i32, i32
  }
  func.func @transform_4(%arg0: i32) -> (i32, i32) {
    %c0_i32 = arith.constant 0 : i32
    %c0_i32_0 = arith.constant 0 : i32
    %c0_i32_1 = arith.constant 0 : i32
    return %c0_i32, %c0_i32_0 : i32, i32
  }
  func.func @transform_5(%arg0: i32) -> (i32, i32) {
    %c0_i32 = arith.constant 0 : i32
    %c0_i32_0 = arith.constant 0 : i32
    %c0_i32_1 = arith.constant 0 : i32
    return %c0_i32, %c0_i32_0 : i32, i32
  }
  func.func @transform_6(%arg0: i32) -> (i32, i32) {
    %c0_i32 = arith.constant 0 : i32
    %c0_i32_0 = arith.constant 0 : i32
    %c0_i32_1 = arith.constant 0 : i32
    return %c0_i32, %c0_i32_0 : i32, i32
  }
  func.func @transform_7(%arg0: i32) -> (i32, i32) {
    %c0_i32 = arith.constant 0 : i32
    %c0_i32_0 = arith.constant 0 : i32
    return %arg0, %c0_i32 : i32, i32
  }
}

</mosaic_0001>

<llo_original>
// kernel: dqn_forward.1
$region0: #{dqn_forward.1}
  #allocation0 [shape = 'u32[]', space=smem, size = 0x4, offset = 0x4, fixed_abs, tag = 'smem constant byte address 0x4 - core index']
  #allocation1 [shape = 'u32[144,128]{1,0:T(1,128)}', space=vmem, size = 0x12000, scoped, tag = 'internal scratch']
  %s0 = inlined_call_operand.vmem [shape: f32[8,8], index: 0, kind: input, shape index: {}]
  %s1 = inlined_call_operand.vmem [shape: f32[8,128], index: 1, kind: input, shape index: {}]
  %s2 = inlined_call_operand.vmem [shape: f32[1,128], index: 2, kind: input, shape index: {}]
  %s3 = inlined_call_operand.hbm [shape: f32[128,128], index: 3, kind: input, shape index: {}]
  %s4 = inlined_call_operand.vmem [shape: f32[1,128], index: 4, kind: input, shape index: {}]
  %s5 = inlined_call_operand.hbm [shape: f32[128,128], index: 5, kind: input, shape index: {}]
  %s6 = inlined_call_operand.vmem [shape: f32[1,128], index: 6, kind: input, shape index: {}]
  %s7 = inlined_call_operand.vmem [shape: f32[8,128], index: 7, kind: output, shape index: {}]
  %s8 = sld [smem:[#allocation0]]
  $region46: #{dqn_forward.1} parent=0
    _
  %s10 = ssub.s32 1, %s8
  %s11 = scalar_select 0, %s10, %s8
  $region1: #{dqn_forward.1} parent=0
    #allocation2 [shape = 'u8[65536]{0}', space=vmem, size = 0x10000, scoped, tag = 'input window, operand 3, single buffered']
    #allocation3 [shape = 's32[1]{0}', space=sflag, size = 0x4, scoped, tag = 'scoped memory for dqn_forward.1']
    #allocation4 [shape = 'u8[65536]{0}', space=vmem, size = 0x10000, scoped, tag = 'input window, operand 5, single buffered']
    #allocation5 [shape = 's32[1]{0}', space=sflag, size = 0x4, scoped, tag = 'scoped memory for dqn_forward.1']
    %12 = vsyncpa [#allocation3], 0
    %13 = vsyncpa [#allocation5], 0
    // Predicated region
    $region2: #{dqn_forward.1} parent=1 // pred_check
      _
    $region3: #{dqn_forward.1} parent=1 // pred_check_branch
      %15 = sbr.rel (0) target = $region5
    $region4: #{dqn_forward.1} parent=1 // pred_region
      _
    $region5: #{dqn_forward.1} parent=1 // pred_fallthru
      _
    // Predicated region
    $region6: #{dqn_forward.1} parent=1 // pred_check
      _
    $region7: #{dqn_forward.1} parent=1 // pred_check_branch
      %17 = sbr.rel (0) target = $region9
    $region8: #{dqn_forward.1} parent=1 // pred_region
      _
    $region9: #{dqn_forward.1} parent=1 // pred_fallthru
      _
    // Predicated region
    $region10: #{dqn_forward.1} parent=1 // pred_check
      _
    $region11: #{dqn_forward.1} parent=1 // pred_check_branch
      %19 = sbr.rel (0) target = $region13
    $region12: #{dqn_forward.1} parent=1 // pred_region
      _
    $region13: #{dqn_forward.1} parent=1 // pred_fallthru
      _
    // Predicated region
    $region14: #{dqn_forward.1} parent=1 // pred_check
      _
    $region15: #{dqn_forward.1} parent=1 // pred_check_branch
      %21 = sbr.rel (0) target = $region17
    $region16: #{dqn_forward.1} parent=1 // pred_region
      %s23 = ssub.s32 2048, 2048
      %24 = vsyncadd [#allocation3], %s23
      %s25 = sshll.u32 [#allocation2], 4
      %s26 = int_to_ptr.vmem [resolvable:$true] %s25
      %31 = dma.hbm_to_vmem [thread:$0]  %s3, 2048, %s26, [#allocation3], 128, 128, 8
    $region17: #{dqn_forward.1} parent=1 // pred_fallthru
      _
    // Predicated region
    $region18: #{dqn_forward.1} parent=1 // pred_check
      _
    $region19: #{dqn_forward.1} parent=1 // pred_check_branch
      %33 = sbr.rel (0) target = $region21
    $region20: #{dqn_forward.1} parent=1 // pred_region
      _
    $region21: #{dqn_forward.1} parent=1 // pred_fallthru
      _
    // Predicated region
    $region22: #{dqn_forward.1} parent=1 // pred_check
      _
    $region23: #{dqn_forward.1} parent=1 // pred_check_branch
      %35 = sbr.rel (0) target = $region25
    $region24: #{dqn_forward.1} parent=1 // pred_region
      %s37 = ssub.s32 2048, 2048
      %38 = vsyncadd [#allocation5], %s37
      %s39 = sshll.u32 [#allocation4], 4
      %s40 = int_to_ptr.vmem [resolvable:$true] %s39
      %45 = dma.hbm_to_vmem [thread:$0]  %s5, 2048, %s40, [#allocation5], 128, 128, 8
    $region25: #{dqn_forward.1} parent=1 // pred_fallthru
      _
    // Predicated region
    $region26: #{dqn_forward.1} parent=1 // pred_check
      _
    $region27: #{dqn_forward.1} parent=1 // pred_check_branch
      %47 = sbr.rel (0) target = $region29
    $region28: #{dqn_forward.1} parent=1 // pred_region
      _
    $region29: #{dqn_forward.1} parent=1 // pred_fallthru
      _
    // Predicated region
    $region30: #{dqn_forward.1} parent=1 // pred_check
      _
    $region31: #{dqn_forward.1} parent=1 // pred_check_branch
      %49 = sbr.rel (0) target = $region33
    $region32: #{dqn_forward.1} parent=1 // pred_region
      %50 = dma.done [#allocation3], 2048
    $region33: #{dqn_forward.1} parent=1 // pred_fallthru
      _
    // Predicated region
    $region34: #{dqn_forward.1} parent=1 // pred_check
      _
    $region35: #{dqn_forward.1} parent=1 // pred_check_branch
      %52 = sbr.rel (0) target = $region37
    $region36: #{dqn_forward.1} parent=1 // pred_region
      %53 = dma.done [#allocation5], 2048
    $region37: #{dqn_forward.1} parent=1 // pred_fallthru
      _
    %v54 = vld [vmem:[%s0] sm:$0xff]
    %v55 = vld [vmem:[%s1] sm:$0xff]
    %v56 = vld [vmem:[%s2] sm:$0x1]
    %v58 = vlaneseq
    %v59 = vshrl.u32 %v58, 7
    %v60 = vsub.s32 0, %v59
    %v61 = vrot.slane %v56, %v60
    %vm63 = vcmask 64512
    %v65 = vsel %vm63, %v54, 0
    %67 = vmatprep.subr.mxu0 0.0
    %68 = vmatpush1.msra.mxu0 0.0
    %69 = vmatprep.subr.mxu0 0.0
    %70 = vmatpush1.msra.mxu0 0.0
    %71 = vmatprep.subr.mxu0 0.0
    %72 = vmatpush1.msra.mxu0 0.0
    %73 = vmatprep.subr.mxu0 0.0
    %74 = vmatpush1.msra.mxu0 0.0
    %75 = vmatprep.subr.mxu0 0.0
    %76 = vmatpush1.msra.mxu0 0.0
    %77 = vmatprep.subr.mxu0 0.0
    %78 = vmatpush1.msra.mxu0 0.0
    %79 = vmatprep.subr.mxu0 0.0
    %80 = vmatpush1.msra.mxu0 0.0
    %81 = vmatprep.subr.mxu0 0.0
    %82 = vmatpush1.msra.mxu0 0.0
    %83 = vmatprep.subr.mxu0 0.0
    %84 = vmatpush1.msra.mxu0 0.0
    %85 = vmatprep.subr.mxu0 0.0
    %86 = vmatpush1.msra.mxu0 0.0
    %87 = vmatprep.subr.mxu0 0.0
    %88 = vmatpush1.msra.mxu0 0.0
    %89 = vmatprep.subr.mxu0 0.0
    %90 = vmatpush1.msra.mxu0 0.0
    %91 = vmatprep.subr.mxu0 0.0
    %92 = vmatpush1.msra.mxu0 0.0
    %93 = vmatprep.subr.mxu0 0.0
    %94 = vmatpush1.msra.mxu0 0.0
    %95 = vmatprep.subr.mxu0 0.0
    %96 = vmatpush1.msra.mxu0 0.0
    %97 = vmatprep.subr.mxu0 0.0
    %98 = vmatpush1.msra.mxu0 %v55
    %99 = vmatprep.subr.mxu0 0.0
    %100 = vmatpush2.msra.mxu0 0.0
    %101 = vmatprep.subr.mxu0 0.0
    %102 = vmatpush2.msra.mxu0 0.0
    %103 = vmatprep.subr.mxu0 0.0
    %104 = vmatpush2.msra.mxu0 0.0
    %105 = vmatprep.subr.mxu0 0.0
    %106 = vmatpush2.msra.mxu0 0.0
    %107 = vmatprep.subr.mxu0 0.0
    %108 = vmatpush2.msra.mxu0 0.0
    %109 = vmatprep.subr.mxu0 0.0
    %110 = vmatpush2.msra.mxu0 0.0
    %111 = vmatprep.subr.mxu0 0.0
    %112 = vmatpush2.msra.mxu0 0.0
    %113 = vmatprep.subr.mxu0 0.0
    %114 = vmatpush2.msra.mxu0 0.0
    %115 = vmatprep.subr.mxu0 0.0
    %116 = vmatpush2.msra.mxu0 0.0
    %117 = vmatprep.subr.mxu0 0.0
    %118 = vmatpush2.msra.mxu0 0.0
    %119 = vmatprep.subr.mxu0 0.0
    %120 = vmatpush2.msra.mxu0 0.0
    %121 = vmatprep.subr.mxu0 0.0
    %122 = vmatpush2.msra.mxu0 0.0
    %123 = vmatprep.subr.mxu0 0.0
    %124 = vmatpush2.msra.mxu0 0.0
    %125 = vmatprep.subr.mxu0 0.0
    %126 = vmatpush2.msra.mxu0 0.0
    %127 = vmatprep.subr.mxu0 0.0
    %128 = vmatpush2.msra.mxu0 0.0
    %129 = vmatprep.subr.mxu0 0.0
    %130 = vmatpush2.msra.mxu0 0.0
    %131 = vmatprep.mubr.f32.mxu0 0.0
    %132 = vmatmul.mubr.f32.gmra.mxu0 %v65
    %v133 = vpop.f32.mrf.mxu0
    %v134 = vadd.f32 %v61, %v133
    %v135 = vpop.f32.mrf.mxu0
    %136 = vdwg.mxu0
    %v137 = vmax.f32 %v134, 0.0
    %v138 = vld [vmem:[#allocation2] sm:$0xff]
    %v139 = vld [vmem:[#allocation2 + $0x8] sm:$0xff]
    %v140 = vld [vmem:[#allocation2 + $0x10] sm:$0xff]
    %v141 = vld [vmem:[#allocation2 + $0x18] sm:$0xff]
    %v142 = vld [vmem:[#allocation2 + $0x20] sm:$0xff]
    %v143 = vld [vmem:[#allocation2 + $0x28] sm:$0xff]
    %v144 = vld [vmem:[#allocation2 + $0x30] sm:$0xff]
    %v145 = vld [vmem:[#allocation2 + $0x38] sm:$0xff]
    %v146 = vld [vmem:[#allocation2 + $0x40] sm:$0xff]
    %v147 = vld [vmem:[#allocation2 + $0x48] sm:$0xff]
    %v148 = vld [vmem:[#allocation2 + $0x50] sm:$0xff]
    %v149 = vld [vmem:[#allocation2 + $0x58] sm:$0xff]
    %v150 = vld [vmem:[#allocation2 + $0x60] sm:$0xff]
    %v151 = vld [vmem:[#allocation2 + $0x68] sm:$0xff]
    %v152 = vld [vmem:[#allocation2 + $0x70] sm:$0xff]
    %v153 = vld [vmem:[#allocation2 + $0x78] sm:$0xff]
    %v154 = vld [vmem:[%s4] sm:$0x1]
    %v156 = vlaneseq
    %v157 = vshrl.u32 %v156, 7
    %v158 = vsub.s32 0, %v157
    %v159 = vrot.slane %v154, %v158
    %161 = vmatprep.subr.mxu0 0.0
    %162 = vmatpush1.msra.mxu0 %v153
    %163 = vmatprep.subr.mxu0 0.0
    %164 = vmatpush1.msra.mxu0 %v152
    %165 = vmatprep.subr.mxu0 0.0
    %166 = vmatpush1.msra.mxu0 %v151
    %167 = vmatprep.subr.mxu0 0.0
    %168 = vmatpush1.msra.mxu0 %v150
    %169 = vmatprep.subr.mxu0 0.0
    %170 = vmatpush1.msra.mxu0 %v149
    %171 = vmatprep.subr.mxu0 0.0
    %172 = vmatpush1.msra.mxu0 %v148
    %173 = vmatprep.subr.mxu0 0.0
    %174 = vmatpush1.msra.mxu0 %v147
    %175 = vmatprep.subr.mxu0 0.0
    %176 = vmatpush1.msra.mxu0 %v146
    %177 = vmatprep.subr.mxu0 0.0
    %178 = vmatpush1.msra.mxu0 %v145
    %179 = vmatprep.subr.mxu0 0.0
    %180 = vmatpush1.msra.mxu0 %v144
    %181 = vmatprep.subr.mxu0 0.0
    %182 = vmatpush1.msra.mxu0 %v143
    %183 = vmatprep.subr.mxu0 0.0
    %184 = vmatpush1.msra.mxu0 %v142
    %185 = vmatprep.subr.mxu0 0.0
    %186 = vmatpush1.msra.mxu0 %v141
    %187 = vmatprep.subr.mxu0 0.0
    %188 = vmatpush1.msra.mxu0 %v140
    %189 = vmatprep.subr.mxu0 0.0
    %190 = vmatpush1.msra.mxu0 %v139
    %191 = vmatprep.subr.mxu0 0.0
    %192 = vmatpush1.msra.mxu0 %v138
    %193 = vmatprep.subr.mxu0 0.0
    %194 = vmatpush2.msra.mxu0 0.0
    %195 = vmatprep.subr.mxu0 0.0
    %196 = vmatpush2.msra.mxu0 0.0
    %197 = vmatprep.subr.mxu0 0.0
    %198 = vmatpush2.msra.mxu0 0.0
    %199 = vmatprep.subr.mxu0 0.0
    %200 = vmatpush2.msra.mxu0 0.0
    %201 = vmatprep.subr.mxu0 0.0
    %202 = vmatpush2.msra.mxu0 0.0
    %203 = vmatprep.subr.mxu0 0.0
    %204 = vmatpush2.msra.mxu0 0.0
    %205 = vmatprep.subr.mxu0 0.0
    %206 = vmatpush2.msra.mxu0 0.0
    %207 = vmatprep.subr.mxu0 0.0
    %208 = vmatpush2.msra.mxu0 0.0
    %209 = vmatprep.subr.mxu0 0.0
    %210 = vmatpush2.msra.mxu0 0.0
    %211 = vmatprep.subr.mxu0 0.0
    %212 = vmatpush2.msra.mxu0 0.0
    %213 = vmatprep.subr.mxu0 0.0
    %214 = vmatpush2.msra.mxu0 0.0
    %215 = vmatprep.subr.mxu0 0.0
    %216 = vmatpush2.msra.mxu0 0.0
    %217 = vmatprep.subr.mxu0 0.0
    %218 = vmatpush2.msra.mxu0 0.0
    %219 = vmatprep.subr.mxu0 0.0
    %220 = vmatpush2.msra.mxu0 0.0
    %221 = vmatprep.subr.mxu0 0.0
    %222 = vmatpush2.msra.mxu0 0.0
    %223 = vmatprep.subr.mxu0 0.0
    %224 = vmatpush2.msra.mxu0 0.0
    %225 = vmatprep.mubr.f32.mxu0 0.0
    %226 = vmatmul.mubr.f32.gmra.mxu0 %v137
    %v227 = vpop.f32.mrf.mxu0
    %v228 = vadd.f32 %v159, %v227
    %v229 = vpop.f32.mrf.mxu0
    %230 = vdwg.mxu0
    %v231 = vmax.f32 %v228, 0.0
    %v232 = vld [vmem:[#allocation4] sm:$0xff]
    %v233 = vld [vmem:[#allocation4 + $0x8] sm:$0xff]
    %v234 = vld [vmem:[#allocation4 + $0x10] sm:$0xff]
    %v235 = vld [vmem:[#allocation4 + $0x18] sm:$0xff]
    %v236 = vld [vmem:[#allocation4 + $0x20] sm:$0xff]
    %v237 = vld [vmem:[#allocation4 + $0x28] sm:$0xff]
    %v238 = vld [vmem:[#allocation4 + $0x30] sm:$0xff]
    %v239 = vld [vmem:[#allocation4 + $0x38] sm:$0xff]
    %v240 = vld [vmem:[#allocation4 + $0x40] sm:$0xff]
    %v241 = vld [vmem:[#allocation4 + $0x48] sm:$0xff]
    %v242 = vld [vmem:[#allocation4 + $0x50] sm:$0xff]
    %v243 = vld [vmem:[#allocation4 + $0x58] sm:$0xff]
    %v244 = vld [vmem:[#allocation4 + $0x60] sm:$0xff]
    %v245 = vld [vmem:[#allocation4 + $0x68] sm:$0xff]
    %v246 = vld [vmem:[#allocation4 + $0x70] sm:$0xff]
    %v247 = vld [vmem:[#allocation4 + $0x78] sm:$0xff]
    %v248 = vld [vmem:[%s6] sm:$0x1]
    %v250 = vlaneseq
    %v251 = vshrl.u32 %v250, 7
    %v252 = vsub.s32 0, %v251
    %v253 = vrot.slane %v248, %v252
    %255 = vmatprep.subr.mxu0 0.0
    %256 = vmatpush1.msra.mxu0 %v247
    %257 = vmatprep.subr.mxu0 0.0
    %258 = vmatpush1.msra.mxu0 %v246
    %259 = vmatprep.subr.mxu0 0.0
    %260 = vmatpush1.msra.mxu0 %v245
    %261 = vmatprep.subr.mxu0 0.0
    %262 = vmatpush1.msra.mxu0 %v244
    %263 = vmatprep.subr.mxu0 0.0
    %264 = vmatpush1.msra.mxu0 %v243
    %265 = vmatprep.subr.mxu0 0.0
    %266 = vmatpush1.msra.mxu0 %v242
    %267 = vmatprep.subr.mxu0 0.0
    %268 = vmatpush1.msra.mxu0 %v241
    %269 = vmatprep.subr.mxu0 0.0
    %270 = vmatpush1.msra.mxu0 %v240
    %271 = vmatprep.subr.mxu0 0.0
    %272 = vmatpush1.msra.mxu0 %v239
    %273 = vmatprep.subr.mxu0 0.0
    %274 = vmatpush1.msra.mxu0 %v238
    %275 = vmatprep.subr.mxu0 0.0
    %276 = vmatpush1.msra.mxu0 %v237
    %277 = vmatprep.subr.mxu0 0.0
    %278 = vmatpush1.msra.mxu0 %v236
    %279 = vmatprep.subr.mxu0 0.0
    %280 = vmatpush1.msra.mxu0 %v235
    %281 = vmatprep.subr.mxu0 0.0
    %282 = vmatpush1.msra.mxu0 %v234
    %283 = vmatprep.subr.mxu0 0.0
    %284 = vmatpush1.msra.mxu0 %v233
    %285 = vmatprep.subr.mxu0 0.0
    %286 = vmatpush1.msra.mxu0 %v232
    %287 = vmatprep.subr.mxu0 0.0
    %288 = vmatpush2.msra.mxu0 0.0
    %289 = vmatprep.subr.mxu0 0.0
    %290 = vmatpush2.msra.mxu0 0.0
    %291 = vmatprep.subr.mxu0 0.0
    %292 = vmatpush2.msra.mxu0 0.0
    %293 = vmatprep.subr.mxu0 0.0
    %294 = vmatpush2.msra.mxu0 0.0
    %295 = vmatprep.subr.mxu0 0.0
    %296 = vmatpush2.msra.mxu0 0.0
    %297 = vmatprep.subr.mxu0 0.0
    %298 = vmatpush2.msra.mxu0 0.0
    %299 = vmatprep.subr.mxu0 0.0
    %300 = vmatpush2.msra.mxu0 0.0
    %301 = vmatprep.subr.mxu0 0.0
    %302 = vmatpush2.msra.mxu0 0.0
    %303 = vmatprep.subr.mxu0 0.0
    %304 = vmatpush2.msra.mxu0 0.0
    %305 = vmatprep.subr.mxu0 0.0
    %306 = vmatpush2.msra.mxu0 0.0
    %307 = vmatprep.subr.mxu0 0.0
    %308 = vmatpush2.msra.mxu0 0.0
    %309 = vmatprep.subr.mxu0 0.0
    %310 = vmatpush2.msra.mxu0 0.0
    %311 = vmatprep.subr.mxu0 0.0
    %312 = vmatpush2.msra.mxu0 0.0
    %313 = vmatprep.subr.mxu0 0.0
    %314 = vmatpush2.msra.mxu0 0.0
    %315 = vmatprep.subr.mxu0 0.0
    %316 = vmatpush2.msra.mxu0 0.0
    %317 = vmatprep.subr.mxu0 0.0
    %318 = vmatpush2.msra.mxu0 0.0
    %319 = vmatprep.mubr.f32.mxu0 0.0
    %320 = vmatmul.mubr.f32.gmra.mxu0 %v231
    %v321 = vpop.f32.mrf.mxu0
    %v322 = vadd.f32 %v253, %v321
    %v323 = vpop.f32.mrf.mxu0
    %324 = vdwg.mxu0
    %325 = vst [vmem:[%s7] sm:$0xff] %v322
    // Predicated region
    $region38: #{dqn_forward.1} parent=1 // pred_check
      _
    $region39: #{dqn_forward.1} parent=1 // pred_check_branch
      %327 = sbr.rel (0) target = $region41
    $region40: #{dqn_forward.1} parent=1 // pred_region
      _
    $region41: #{dqn_forward.1} parent=1 // pred_fallthru
      _
    // Predicated region
    $region42: #{dqn_forward.1} parent=1 // pred_check
      _
    $region43: #{dqn_forward.1} parent=1 // pred_check_branch
      %329 = sbr.rel (0) target = $region45
    $region44: #{dqn_forward.1} parent=1 // pred_region
      _
    $region45: #{dqn_forward.1} parent=1 // pred_fallthru
      _
    %330 = vsyncpa [#allocation3], 1
    %331 = vsyncpa [#allocation5], 1

</llo_original>
